<compile_context>
chip_gen: v7x
topology: tpu7x:2x2x1
jax: 0.10.0
libtpu: 0.0.40
codegen_flags: <defaults>
</compile_context>

<pallas_src>
import functools

import jax
import jax.numpy as jnp
from jax.experimental import pallas as pl
from jax.experimental.pallas import tpu as pltpu


def _round_up(x, m):
    return (x + m - 1) // m * m


def _cdiv(a, b):
    return -(-a // b)


# --------------------------------------------------------------------------- #
# Kernel
# --------------------------------------------------------------------------- #
def dense_kernel(num_hidden, out_valid,
                 x_ref, w1_ref, b1_ref, wh_ref, bh_ref, w2_ref, b2_ref, o_ref):
    cdt = w1_ref.dtype  # MXU input dtype (f32 or bf16); accumulation is f32.

    # fc1 (no relu, matching the reference forward)
    h = jnp.dot(x_ref[...].astype(cdt), w1_ref[...],
                preferred_element_type=jnp.float32)
    h = h + b1_ref[...].astype(jnp.float32)

    # hidden fcs layers, each followed by relu
    def layer(w, b, h):
        z = jnp.dot(h.astype(cdt), w, preferred_element_type=jnp.float32)
        return jnp.maximum(z + b.astype(jnp.float32), 0.0)

    if 0 < num_hidden <= 4:
        # Shallow: unroll statically so MXU pushes overlap bias/ReLU VPU work.
        for i in range(num_hidden):
            h = layer(wh_ref[i], bh_ref[i], h)
    elif num_hidden > 4:
        # Deep: rolled loop bounds live ranges / code size.
        h = jax.lax.fori_loop(
            0, num_hidden, lambda i, h: layer(wh_ref[i], bh_ref[i], h), h)

    # fc2
    logits = jnp.dot(h.astype(cdt), w2_ref[...],
                     preferred_element_type=jnp.float32)
    logits = logits + b2_ref[...].astype(jnp.float32)

    # mask the zero-padded output columns so they don't pollute the softmax
    if out_valid < logits.shape[-1]:
        col = jax.lax.broadcasted_iota(jnp.int32, logits.shape, 1)
        logits = jnp.where(col < out_valid, logits, -jnp.inf)

    # softmax over dim=1 (feature axis) — exact normalization.
    m = jnp.max(logits, axis=-1, keepdims=True)
    e = jnp.exp(logits - m)
    denom = jnp.sum(e, axis=-1, keepdims=True)
    o_ref[...] = (e / denom).astype(o_ref.dtype)


# --------------------------------------------------------------------------- #
# One-time parameter preparation (hoisted out of the forward pass)
# --------------------------------------------------------------------------- #
def prepare_params(params, *, weight_dtype=jnp.float32):
    """Pad/cast the weight stack once; reuse the result across forward calls.

    params: w1 (I,H), b1 (H,), wh (L-1,H,H), bh (L-1,H), w2 (H,O), b2 (O,)
    (weights already in (in, out) layout — transpose PyTorch Linear weights
    in glue code)."""
    w1, b1 = params["w1"], params["b1"]
    wh, bh = params["wh"], params["bh"]
    w2, b2 = params["w2"], params["b2"]

    I, H = w1.shape
    O = w2.shape[1]
    num_hidden = wh.shape[0]

    I_pad = _round_up(I, 128)
    H_pad = _round_up(H, 128)
    O_pad = _round_up(O, 128)

    f32 = jnp.float32
    w1p = jnp.zeros((I_pad, H_pad), weight_dtype).at[:I, :H].set(
        w1.astype(weight_dtype))
    b1p = jnp.zeros((1, H_pad), f32).at[:, :H].set(b1.reshape(1, H).astype(f32))
    if num_hidden > 0:
        whp = jnp.zeros((num_hidden, H_pad, H_pad), weight_dtype)
        whp = whp.at[:, :H, :H].set(wh.astype(weight_dtype))
        bhp = jnp.zeros((num_hidden, 1, H_pad), f32)
        bhp = bhp.at[:, :, :H].set(bh.reshape(num_hidden, 1, H).astype(f32))
    else:
        # num_layers == 1: no hidden fcs. Tiny dummies keep the call signature
        # uniform; the kernel never touches them (loop statically elided).
        whp = jnp.zeros((1, 8, 128), weight_dtype)
        bhp = jnp.zeros((1, 1, 128), f32)
    w2p = jnp.zeros((H_pad, O_pad), weight_dtype).at[:H, :O].set(
        w2.astype(weight_dtype))
    b2p = jnp.zeros((1, O_pad), f32).at[:, :O].set(b2.reshape(1, O).astype(f32))

    return dict(w1p=w1p, b1p=b1p, whp=whp, bhp=bhp, w2p=w2p, b2p=b2p,
                I=I, H=H, O=O, I_pad=I_pad, H_pad=H_pad, O_pad=O_pad,
                num_hidden=num_hidden, weight_dtype=weight_dtype)


# --------------------------------------------------------------------------- #
# Forward wrapper
# --------------------------------------------------------------------------- #
def _const_spec(shape):
    """Weights never change across batch tiles: constant index map, and
    single-buffered so the resident VMEM isn't doubled for nothing."""
    zeros = (0,) * len(shape)
    index_map = lambda i, _z=zeros: _z
    try:
        return pl.BlockSpec(shape, index_map, pipeline_mode=pl.Buffered(1))
    except Exception:  # older jax without pipeline_mode — fall back to default
        return pl.BlockSpec(shape, index_map)


def _pick_vmem_limit(tb, I_pad, H_pad, O_pad, num_hidden, weight_dtype,
                     act_dtype):
    wd = jnp.dtype(weight_dtype).itemsize
    ad = jnp.dtype(act_dtype).itemsize
    weights = (I_pad * H_pad + max(num_hidden, 1) * H_pad * H_pad
               + H_pad * O_pad) * wd                       # single-buffered
    biases = (H_pad * (max(num_hidden, 1) + 1) + O_pad) * 4
    io_tiles = 2 * tb * I_pad * ad + 2 * tb * O_pad * 4    # double-buffered
    working = 4 * tb * H_pad * 4                           # in-flight h / spill
    need = weights + biases + io_tiles + working + (4 << 20)
    try:  # use physical VMEM when queryable (128 MiB v5e/v6e, 64 MiB v7x)
        phys = int(getattr(pltpu.get_tpu_info(), "vmem_capacity_bytes",
                           64 * 1024 * 1024))
    except Exception:
        phys = 64 * 1024 * 1024
    return int(min(max(need, 32 << 20), phys - (2 << 20)))


def dense_forward(x, params, *, tb=None, weight_dtype=jnp.float32):
    """x: (B, input_size). params: raw param dict or prepare_params() output.
    Returns (B, output_size) float32 softmax probabilities."""
    prepared = params if "w1p" in params else prepare_params(
        params, weight_dtype=weight_dtype)

    w1p, b1p = prepared["w1p"], prepared["b1p"]
    whp, bhp = prepared["whp"], prepared["bhp"]
    w2p, b2p = prepared["w2p"], prepared["b2p"]
    I, O = prepared["I"], prepared["O"]
    I_pad, H_pad, O_pad = prepared["I_pad"], prepared["H_pad"], prepared["O_pad"]
    num_hidden = prepared["num_hidden"]
    wdt = prepared["weight_dtype"]

    B = x.shape[0]
    assert x.shape[1] == I, "input feature size mismatch"

    # Balanced batch tiles: ~512 rows/tile max, avoid a nearly-empty trailing
    # tile, and give v7x's two TensorCores at least two tiles when B >= 256.
    if tb is None:
        n_tiles = max(1, _cdiv(B, 512))
        if B >= 256:
            n_tiles = max(n_tiles, 2)
        tb = _round_up(_cdiv(B, n_tiles), 8)
    tb = max(int(tb), 8)
    B_pad = _round_up(B, tb)

    # Activations travel in the MXU input dtype (bf16 halves the per-step DMA).
    act_dtype = wdt if jnp.dtype(wdt).itemsize < 4 else jnp.float32
    xp = jnp.zeros((B_pad, I_pad), act_dtype).at[:B, :I].set(x.astype(act_dtype))

    kernel = functools.partial(dense_kernel, num_hidden, O)

    grid_spec = pltpu.PrefetchScalarGridSpec(
        num_scalar_prefetch=0,
        grid=(B_pad // tb,),
        in_specs=[
            pl.BlockSpec((tb, I_pad), lambda i: (i, 0)),  # batch-tiled acts
            _const_spec(w1p.shape),                       # VMEM-resident weights
            _const_spec(b1p.shape),
            _const_spec(whp.shape),
            _const_spec(bhp.shape),
            _const_spec(w2p.shape),
            _const_spec(b2p.shape),
        ],
        out_specs=pl.BlockSpec((tb, O_pad), lambda i: (i, 0)),  # lane-dense out
    )

    out = pl.pallas_call(
        kernel,
        out_shape=jax.ShapeDtypeStruct((B_pad, O_pad), jnp.float32),
        grid_spec=grid_spec,
        compiler_params=pltpu.CompilerParams(
            dimension_semantics=("parallel",),
            vmem_limit_bytes=_pick_vmem_limit(tb, I_pad, H_pad, O_pad,
                                              num_hidden, wdt, act_dtype),
        ),
    )(xp, w1p, b1p, whp, bhp, w2p, b2p)

    return out[:B, :O]


# --------------------------------------------------------------------------- #
# Test harness
# --------------------------------------------------------------------------- #
def init_params(key, input_size, hidden_size, output_size, num_layers=1):
    ks = jax.random.split(key, 6)
    nh = num_layers - 1
    w1 = jax.random.normal(ks[0], (input_size, hidden_size), jnp.float32) * 0.1
    b1 = jax.random.normal(ks[1], (hidden_size,), jnp.float32) * 0.1
    wh = jax.random.normal(ks[2], (nh, hidden_size, hidden_size), jnp.float32) * 0.1
    bh = jax.random.normal(ks[3], (nh, hidden_size), jnp.float32) * 0.1
    w2 = jax.random.normal(ks[4], (hidden_size, output_size), jnp.float32) * 0.1
    b2 = jax.random.normal(ks[5], (output_size,), jnp.float32) * 0.1
    return dict(w1=w1, b1=b1, wh=wh, bh=bh, w2=w2, b2=b2)


def reference_forward(x, params):
    h = x @ params["w1"] + params["b1"].reshape(1, -1)
    for i in range(params["wh"].shape[0]):
        h = h @ params["wh"][i] + params["bh"][i].reshape(1, -1)
        h = jnp.maximum(h, 0.0)
    logits = h @ params["w2"] + params["b2"].reshape(1, -1)
    return jax.nn.softmax(logits, axis=1)


if __name__ == "__main__":
    batch, input_size, hidden_size, output_size, num_layers = 8, 32, 64, 16, 2

    key = jax.random.PRNGKey(0)
    k_x, k_p = jax.random.split(key)
    x = jax.random.normal(k_x, (batch, input_size), jnp.float32)
    params = init_params(k_p, input_size, hidden_size, output_size, num_layers)

    # f32 path — weights padded/cast ONCE, reused across calls.
    prepared = prepare_params(params)
    out = jax.block_until_ready(dense_forward(x, prepared))
    ref = reference_forward(x, params)
    assert out.shape == (batch, output_size)
    assert jnp.allclose(out, ref, atol=2e-3, rtol=2e-3), "mismatch vs reference (f32)"
    assert jnp.allclose(jnp.sum(out, axis=1), 1.0, atol=1e-3), "softmax rows must sum to 1"

    # num_layers == 1 edge case (no hidden fcs — the PyTorch default)
    params1 = init_params(k_p, input_size, hidden_size, output_size, 1)
    out1 = jax.block_until_ready(dense_forward(x, params1))
    ref1 = reference_forward(x, params1)
    assert jnp.allclose(out1, ref1, atol=2e-3, rtol=2e-3), "mismatch vs reference (L=1)"

    # bf16 weight + activation MXU path (v5e/v6e/v7x), looser tolerance
    prepared_bf16 = prepare_params(params, weight_dtype=jnp.bfloat16)
    out_bf16 = jax.block_until_ready(dense_forward(x, prepared_bf16))
    assert jnp.allclose(out_bf16, ref, atol=5e-2, rtol=5e-2), "mismatch vs reference (bf16)"
    assert jnp.allclose(jnp.sum(out_bf16, axis=1), 1.0, atol=1e-3), "bf16 softmax rows must sum to 1"

    print("KERNEL_OK")
</pallas_src>

<mosaic_0001>
module attributes {stable_mosaic.version = 11 : i64} {
  func.func @dense_kernel(%arg0: i32, %arg1: memref<8x128xf32, #tpu.memory_space<vmem>>, %arg2: memref<128x128xf32, #tpu.memory_space<vmem>>, %arg3: memref<1x128xf32, #tpu.memory_space<vmem>>, %arg4: memref<1x128x128xf32, #tpu.memory_space<vmem>>, %arg5: memref<1x1x128xf32, #tpu.memory_space<vmem>>, %arg6: memref<128x128xf32, #tpu.memory_space<vmem>>, %arg7: memref<1x128xf32, #tpu.memory_space<vmem>>, %arg8: memref<8x128xf32, #tpu.memory_space<vmem>>) attributes {dimension_semantics = [#tpu.dimension_semantics<parallel>], iteration_bounds = array<i64: 1>, scalar_prefetch = 0 : i64, scratch_operands = 0 : i64, tpu.core_type = #tpu.core_type<tc>, window_params = [{transform_indices = @transform_0, window_bounds = array<i64: 8, 128>}, {pipeline_mode = #tpu.pipeline_mode<synchronous>, transform_indices = @transform_1, window_bounds = array<i64: 128, 128>}, {pipeline_mode = #tpu.pipeline_mode<synchronous>, transform_indices = @transform_2, window_bounds = array<i64: 1, 128>}, {pipeline_mode = #tpu.pipeline_mode<synchronous>, transform_indices = @transform_3, window_bounds = array<i64: 1, 128, 128>}, {pipeline_mode = #tpu.pipeline_mode<synchronous>, transform_indices = @transform_4, window_bounds = array<i64: 1, 1, 128>}, {pipeline_mode = #tpu.pipeline_mode<synchronous>, transform_indices = @transform_5, window_bounds = array<i64: 128, 128>}, {pipeline_mode = #tpu.pipeline_mode<synchronous>, transform_indices = @transform_6, window_bounds = array<i64: 1, 128>}, {transform_indices = @transform_7, window_bounds = array<i64: 8, 128>}]} {
    %c0 = arith.constant 0 : index
    %c0_0 = arith.constant 0 : index
    %0 = vector.load %arg1[%c0, %c0_0] : memref<8x128xf32, #tpu.memory_space<vmem>>, vector<8x128xf32>
    %c0_1 = arith.constant 0 : index
    %c0_2 = arith.constant 0 : index
    %1 = vector.load %arg2[%c0_1, %c0_2] : memref<128x128xf32, #tpu.memory_space<vmem>>, vector<128x128xf32>
    %cst = arith.constant dense<0.000000e+00> : vector<8x128xf32>
    %2 = tpu.matmul %0, %1, %cst {dimension_numbers = #tpu.dot_dimension_numbers<[1], [0], [0], [1], [0, 0, 1, 1], [], []>} : vector<8x128xf32>, vector<128x128xf32>, vector<8x128xf32> -> vector<8x128xf32>
    %c0_3 = arith.constant 0 : index
    %c0_4 = arith.constant 0 : index
    %3 = vector.load %arg3[%c0_3, %c0_4] : memref<1x128xf32, #tpu.memory_space<vmem>>, vector<1x128xf32>
    %4 = vector.broadcast %3 : vector<1x128xf32> to vector<8x128xf32>
    %5 = arith.addf %2, %4 : vector<8x128xf32>
    %c0_5 = arith.constant 0 : index
    %c0_6 = arith.constant 0 : index
    %c0_7 = arith.constant 0 : index
    %6 = vector.load %arg4[%c0_5, %c0_6, %c0_7] : memref<1x128x128xf32, #tpu.memory_space<vmem>>, vector<1x128x128xf32>
    %7 = vector.shape_cast %6 : vector<1x128x128xf32> to vector<128x128xf32>
    %c0_8 = arith.constant 0 : index
    %c0_9 = arith.constant 0 : index
    %c0_10 = arith.constant 0 : index
    %8 = vector.load %arg5[%c0_8, %c0_9, %c0_10] : memref<1x1x128xf32, #tpu.memory_space<vmem>>, vector<1x1x128xf32>
    %9 = vector.shape_cast %8 : vector<1x1x128xf32> to vector<1x128xf32>
    %cst_11 = arith.constant dense<0.000000e+00> : vector<8x128xf32>
    %10 = tpu.matmul %5, %7, %cst_11 {dimension_numbers = #tpu.dot_dimension_numbers<[1], [0], [0], [1], [0, 0, 1, 1], [], []>} : vector<8x128xf32>, vector<128x128xf32>, vector<8x128xf32> -> vector<8x128xf32>
    %11 = vector.broadcast %9 : vector<1x128xf32> to vector<8x128xf32>
    %12 = arith.addf %10, %11 : vector<8x128xf32>
    %cst_12 = arith.constant 0.000000e+00 : f32
    %13 = vector.broadcast %cst_12 : f32 to vector<8x128xf32>
    %14 = arith.maximumf %12, %13 : vector<8x128xf32>
    %c0_13 = arith.constant 0 : index
    %c0_14 = arith.constant 0 : index
    %15 = vector.load %arg6[%c0_13, %c0_14] : memref<128x128xf32, #tpu.memory_space<vmem>>, vector<128x128xf32>
    %cst_15 = arith.constant dense<0.000000e+00> : vector<8x128xf32>
    %16 = tpu.matmul %14, %15, %cst_15 {dimension_numbers = #tpu.dot_dimension_numbers<[1], [0], [0], [1], [0, 0, 1, 1], [], []>} : vector<8x128xf32>, vector<128x128xf32>, vector<8x128xf32> -> vector<8x128xf32>
    %c0_16 = arith.constant 0 : index
    %c0_17 = arith.constant 0 : index
    %17 = vector.load %arg7[%c0_16, %c0_17] : memref<1x128xf32, #tpu.memory_space<vmem>>, vector<1x128xf32>
    %18 = vector.broadcast %17 : vector<1x128xf32> to vector<8x128xf32>
    %19 = arith.addf %16, %18 : vector<8x128xf32>
    %20 = tpu.iota {dimensions = array<i32: 1>} : vector<8x128xi32>
    %c16_i32 = arith.constant 16 : i32
    %21 = vector.broadcast %c16_i32 : i32 to vector<8x128xi32>
    %22 = arith.cmpi slt, %20, %21 : vector<8x128xi32>
    %cst_18 = arith.constant 0xFF800000 : f32
    %23 = vector.broadcast %cst_18 : f32 to vector<8x128xf32>
    %24 = arith.select %22, %19, %23 : vector<8x128xi1>, vector<8x128xf32>
    %cst_19 = arith.constant dense<0xFF800000> : vector<8xf32>
    %25 = vector.multi_reduction <maximumf>, %24, %cst_19 [1] : vector<8x128xf32> to vector<8xf32>
    %26 = vector.shape_cast %25 : vector<8xf32> to vector<8x1xf32>
    %27 = vector.broadcast %26 : vector<8x1xf32> to vector<8x128xf32>
    %28 = arith.subf %24, %27 : vector<8x128xf32>
    %29 = math.exp %28 : vector<8x128xf32>
    %cst_20 = arith.constant dense<0.000000e+00> : vector<8xf32>
    %30 = vector.multi_reduction <add>, %29, %cst_20 [1] : vector<8x128xf32> to vector<8xf32>
    %31 = vector.shape_cast %30 : vector<8xf32> to vector<8x1xf32>
    %32 = vector.broadcast %31 : vector<8x1xf32> to vector<8x128xf32>
    %33 = arith.divf %29, %32 : vector<8x128xf32>
    %c0_21 = arith.constant 0 : index
    %c0_22 = arith.constant 0 : index
    %34 = vector.load %arg8[%c0_21, %c0_22] : memref<8x128xf32, #tpu.memory_space<vmem>>, vector<8x128xf32>
    tpu.vector_store %arg8[%c0_21, %c0_22], %33 {strides = array<i32>} : memref<8x128xf32, #tpu.memory_space<vmem>>, vector<8x128xf32>,
    return
  }
  func.func @transform_0(%arg0: i32) -> (i32, i32) {
    %c0_i32 = arith.constant 0 : i32
    %c0_i32_0 = arith.constant 0 : i32
    return %arg0, %c0_i32 : i32, i32
  }
  func.func @transform_1(%arg0: i32) -> (i32, i32) {
    %c0_i32 = arith.constant 0 : i32
    %c0_i32_0 = arith.constant 0 : i32
    %c0_i32_1 = arith.constant 0 : i32
    return %c0_i32, %c0_i32_0 : i32, i32
  }
  func.func @transform_2(%arg0: i32) -> (i32, i32) {
    %c0_i32 = arith.constant 0 : i32
    %c0_i32_0 = arith.constant 0 : i32
    %c0_i32_1 = arith.constant 0 : i32
    return %c0_i32, %c0_i32_0 : i32, i32
  }
  func.func @transform_3(%arg0: i32) -> (i32, i32, i32) {
    %c0_i32 = arith.constant 0 : i32
    %c0_i32_0 = arith.constant 0 : i32
    %c0_i32_1 = arith.constant 0 : i32
    %c0_i32_2 = arith.constant 0 : i32
    return %c0_i32, %c0_i32_0, %c0_i32_1 : i32, i32, i32
  }
  func.func @transform_4(%arg0: i32) -> (i32, i32, i32) {
    %c0_i32 = arith.constant 0 : i32
    %c0_i32_0 = arith.constant 0 : i32
    %c0_i32_1 = arith.constant 0 : i32
    %c0_i32_2 = arith.constant 0 : i32
    return %c0_i32, %c0_i32_0, %c0_i32_1 : i32, i32, i32
  }
  func.func @transform_5(%arg0: i32) -> (i32, i32) {
    %c0_i32 = arith.constant 0 : i32
    %c0_i32_0 = arith.constant 0 : i32
    %c0_i32_1 = arith.constant 0 : i32
    return %c0_i32, %c0_i32_0 : i32, i32
  }
  func.func @transform_6(%arg0: i32) -> (i32, i32) {
    %c0_i32 = arith.constant 0 : i32
    %c0_i32_0 = arith.constant 0 : i32
    %c0_i32_1 = arith.constant 0 : i32
    return %c0_i32, %c0_i32_0 : i32, i32
  }
  func.func @transform_7(%arg0: i32) -> (i32, i32) {
    %c0_i32 = arith.constant 0 : i32
    %c0_i32_0 = arith.constant 0 : i32
    return %arg0, %c0_i32 : i32, i32
  }
}

</mosaic_0001>

<llo_original>
// kernel: tpu_custom_call.1
$region0: #{tpu_custom_call.1}
  #allocation0 [shape = 'u32[]', space=smem, size = 0x4, offset = 0x4, fixed_abs, tag = 'smem constant byte address 0x4 - core index']
  #allocation1 [shape = 'u32[144,128]{1,0:T(1,128)}', space=vmem, size = 0x12000, scoped, tag = 'internal scratch']
  %s0 = inlined_call_operand.hbm [shape: f32[8,128], index: 0, kind: input, shape index: {}]
  %s1 = inlined_call_operand.hbm [shape: f32[128,128], index: 1, kind: input, shape index: {}]
  %s2 = inlined_call_operand.vmem [shape: f32[1,128], index: 2, kind: input, shape index: {}]
  %s3 = inlined_call_operand.hbm [shape: f32[1,128,128], index: 3, kind: input, shape index: {}]
  %s4 = inlined_call_operand.vmem [shape: f32[1,1,128], index: 4, kind: input, shape index: {}]
  %s5 = inlined_call_operand.hbm [shape: f32[128,128], index: 5, kind: input, shape index: {}]
  %s6 = inlined_call_operand.vmem [shape: f32[1,128], index: 6, kind: input, shape index: {}]
  %s7 = inlined_call_operand.hbm [shape: f32[8,128], index: 7, kind: output, shape index: {}]
  %s8 = sld [smem:[#allocation0]]
  $region54: #{tpu_custom_call.1} parent=0
    _
  %s10 = ssub.s32 1, %s8
  %s11 = scalar_select 0, %s10, %s8
  $region1: #{tpu_custom_call.1} parent=0
    #allocation2 [shape = 'u8[4096]{0}', space=vmem, size = 0x1000, scoped, tag = 'input window, operand 0, single buffered']
    #allocation3 [shape = 's32[1]{0}', space=sflag, size = 0x4, scoped, tag = 'scoped memory for tpu_custom_call.1']
    #allocation4 [shape = 's32[1]{0}', space=sflag, size = 0x4, scoped, tag = 'scoped memory for tpu_custom_call.1']
    #allocation5 [shape = 'u8[65536]{0}', space=vmem, size = 0x10000, scoped, tag = 'input window, operand 1, single buffered']
    #allocation6 [shape = 's32[1]{0}', space=sflag, size = 0x4, scoped, tag = 'scoped memory for tpu_custom_call.1']
    #allocation7 [shape = 'u8[65536]{0}', space=vmem, size = 0x10000, scoped, tag = 'input window, operand 3, single buffered']
    #allocation8 [shape = 'u8[65536]{0}', space=vmem, size = 0x10000, scoped, tag = 'input window, operand 5, single buffered']
    #allocation9 [shape = 's32[1]{0}', space=sflag, size = 0x4, scoped, tag = 'scoped memory for tpu_custom_call.1']
    #allocation10 [shape = 'u8[4096]{0}', space=vmem, size = 0x1000, scoped, tag = 'output window, operand 0, single buffered']
    %12 = vsyncpa [#allocation3], 0
    %13 = vsyncpa [#allocation6], 0
    %14 = vsyncpa [#allocation9], 0
    %15 = vsyncpa [#allocation4], 0
    // Predicated region
    $region2: #{tpu_custom_call.1} parent=1 // pred_check
      _
    $region3: #{tpu_custom_call.1} parent=1 // pred_check_branch
      %17 = sbr.rel (0) target = $region5
    $region4: #{tpu_custom_call.1} parent=1 // pred_region
      %s19 = ssub.s32 128, 128
      %20 = vsyncadd [#allocation3], %s19
      %s22 = sshll.u32 [#allocation2], 4
      %s23 = int_to_ptr.vmem [resolvable:$true] %s22
      %25 = dma.hbm_to_vmem [thread:$0]  %s0, 128, %s23, [#allocation3]
    $region5: #{tpu_custom_call.1} parent=1 // pred_fallthru
      _
    // Predicated region
    $region6: #{tpu_custom_call.1} parent=1 // pred_check
      _
    $region7: #{tpu_custom_call.1} parent=1 // pred_check_branch
      %27 = sbr.rel (0) target = $region9
    $region8: #{tpu_custom_call.1} parent=1 // pred_region
      %s29 = ssub.s32 2048, 2048
      %30 = vsyncadd [#allocation6], %s29
      %s31 = sshll.u32 [#allocation5], 4
      %s32 = int_to_ptr.vmem [resolvable:$true] %s31
      %37 = dma.hbm_to_vmem [thread:$0]  %s1, 2048, %s32, [#allocation6], 128, 128, 8
    $region9: #{tpu_custom_call.1} parent=1 // pred_fallthru
      _
    // Predicated region
    $region10: #{tpu_custom_call.1} parent=1 // pred_check
      _
    $region11: #{tpu_custom_call.1} parent=1 // pred_check_branch
      %39 = sbr.rel (0) target = $region13
    $region12: #{tpu_custom_call.1} parent=1 // pred_region
      _
    $region13: #{tpu_custom_call.1} parent=1 // pred_fallthru
      _
    // Predicated region
    $region14: #{tpu_custom_call.1} parent=1 // pred_check
      _
    $region15: #{tpu_custom_call.1} parent=1 // pred_check_branch
      %41 = sbr.rel (0) target = $region17
    $region16: #{tpu_custom_call.1} parent=1 // pred_region
      %s43 = ssub.s32 2048, 2048
      %44 = vsyncadd [#allocation6], %s43
      %s45 = sshll.u32 [#allocation7], 4
      %s46 = int_to_ptr.vmem [resolvable:$true] %s45
      %51 = dma.hbm_to_vmem [thread:$0]  %s3, 2048, %s46, [#allocation6], 128, 128, 8
    $region17: #{tpu_custom_call.1} parent=1 // pred_fallthru
      _
    // Predicated region
    $region18: #{tpu_custom_call.1} parent=1 // pred_check
      _
    $region19: #{tpu_custom_call.1} parent=1 // pred_check_branch
      %53 = sbr.rel (0) target = $region21
    $region20: #{tpu_custom_call.1} parent=1 // pred_region
      _
    $region21: #{tpu_custom_call.1} parent=1 // pred_fallthru
      _
    // Predicated region
    $region22: #{tpu_custom_call.1} parent=1 // pred_check
      _
    $region23: #{tpu_custom_call.1} parent=1 // pred_check_branch
      %55 = sbr.rel (0) target = $region25
    $region24: #{tpu_custom_call.1} parent=1 // pred_region
      %s57 = ssub.s32 2048, 2048
      %58 = vsyncadd [#allocation9], %s57
      %s59 = sshll.u32 [#allocation8], 4
      %s60 = int_to_ptr.vmem [resolvable:$true] %s59
      %65 = dma.hbm_to_vmem [thread:$0]  %s5, 2048, %s60, [#allocation9], 128, 128, 8
    $region25: #{tpu_custom_call.1} parent=1 // pred_fallthru
      _
    // Predicated region
    $region26: #{tpu_custom_call.1} parent=1 // pred_check
      _
    $region27: #{tpu_custom_call.1} parent=1 // pred_check_branch
      %67 = sbr.rel (0) target = $region29
    $region28: #{tpu_custom_call.1} parent=1 // pred_region
      _
    $region29: #{tpu_custom_call.1} parent=1 // pred_fallthru
      _
    // Predicated region
    $region30: #{tpu_custom_call.1} parent=1 // pred_check
      _
    $region31: #{tpu_custom_call.1} parent=1 // pred_check_branch
      %69 = sbr.rel (0) target = $region33
    $region32: #{tpu_custom_call.1} parent=1 // pred_region
      %70 = dma.done [#allocation3], 128
    $region33: #{tpu_custom_call.1} parent=1 // pred_fallthru
      _
    // Predicated region
    $region34: #{tpu_custom_call.1} parent=1 // pred_check
      _
    $region35: #{tpu_custom_call.1} parent=1 // pred_check_branch
      %72 = sbr.rel (0) target = $region37
    $region36: #{tpu_custom_call.1} parent=1 // pred_region
      %73 = dma.done [#allocation6], 2048
    $region37: #{tpu_custom_call.1} parent=1 // pred_fallthru
      _
    // Predicated region
    $region38: #{tpu_custom_call.1} parent=1 // pred_check
      _
    $region39: #{tpu_custom_call.1} parent=1 // pred_check_branch
      %75 = sbr.rel (0) target = $region41
    $region40: #{tpu_custom_call.1} parent=1 // pred_region
      %76 = dma.done [#allocation6], 2048
    $region41: #{tpu_custom_call.1} parent=1 // pred_fallthru
      _
    // Predicated region
    $region42: #{tpu_custom_call.1} parent=1 // pred_check
      _
    $region43: #{tpu_custom_call.1} parent=1 // pred_check_branch
      %78 = sbr.rel (0) target = $region45
    $region44: #{tpu_custom_call.1} parent=1 // pred_region
      %79 = dma.done [#allocation9], 2048
    $region45: #{tpu_custom_call.1} parent=1 // pred_fallthru
      _
    %v80 = vld [vmem:[#allocation2] sm:$0xff]
    %v81 = vld [vmem:[#allocation5] sm:$0xff]
    %v82 = vld [vmem:[#allocation5 + $0x8] sm:$0xff]
    %v83 = vld [vmem:[#allocation5 + $0x10] sm:$0xff]
    %v84 = vld [vmem:[#allocation5 + $0x18] sm:$0xff]
    %v85 = vld [vmem:[#allocation5 + $0x20] sm:$0xff]
    %v86 = vld [vmem:[#allocation5 + $0x28] sm:$0xff]
    %v87 = vld [vmem:[#allocation5 + $0x30] sm:$0xff]
    %v88 = vld [vmem:[#allocation5 + $0x38] sm:$0xff]
    %v89 = vld [vmem:[#allocation5 + $0x40] sm:$0xff]
    %v90 = vld [vmem:[#allocation5 + $0x48] sm:$0xff]
    %v91 = vld [vmem:[#allocation5 + $0x50] sm:$0xff]
    %v92 = vld [vmem:[#allocation5 + $0x58] sm:$0xff]
    %v93 = vld [vmem:[#allocation5 + $0x60] sm:$0xff]
    %v94 = vld [vmem:[#allocation5 + $0x68] sm:$0xff]
    %v95 = vld [vmem:[#allocation5 + $0x70] sm:$0xff]
    %v96 = vld [vmem:[#allocation5 + $0x78] sm:$0xff]
    %v97 = vld [vmem:[%s2] sm:$0x1]
    %v99 = vlaneseq
    %v100 = vshrl.u32 %v99, 7
    %v101 = vsub.s32 0, %v100
    %v102 = vrot.slane %v97, %v101
    %104 = vmatprep.subr.mxu0 0.0
    %105 = vmatpush1.msra.mxu0 %v81
    %106 = vmatprep.subr.mxu0 0.0
    %107 = vmatpush1.msra.mxu0 %v82
    %108 = vmatprep.subr.mxu0 0.0
    %109 = vmatpush1.msra.mxu0 %v83
    %110 = vmatprep.subr.mxu0 0.0
    %111 = vmatpush1.msra.mxu0 %v84
    %112 = vmatprep.subr.mxu0 0.0
    %113 = vmatpush1.msra.mxu0 %v85
    %114 = vmatprep.subr.mxu0 0.0
    %115 = vmatpush1.msra.mxu0 %v86
    %116 = vmatprep.subr.mxu0 0.0
    %117 = vmatpush1.msra.mxu0 %v87
    %118 = vmatprep.subr.mxu0 0.0
    %119 = vmatpush1.msra.mxu0 %v88
    %120 = vmatprep.subr.mxu0 0.0
    %121 = vmatpush1.msra.mxu0 %v89
    %122 = vmatprep.subr.mxu0 0.0
    %123 = vmatpush1.msra.mxu0 %v90
    %124 = vmatprep.subr.mxu0 0.0
    %125 = vmatpush1.msra.mxu0 %v91
    %126 = vmatprep.subr.mxu0 0.0
    %127 = vmatpush1.msra.mxu0 %v92
    %128 = vmatprep.subr.mxu0 0.0
    %129 = vmatpush1.msra.mxu0 %v93
    %130 = vmatprep.subr.mxu0 0.0
    %131 = vmatpush1.msra.mxu0 %v94
    %132 = vmatprep.subr.mxu0 0.0
    %133 = vmatpush1.msra.mxu0 %v95
    %134 = vmatprep.subr.mxu0 0.0
    %135 = vmatpush1.msra.mxu0 %v96
    %136 = vmatprep.subr.mxu0 0.0
    %137 = vmatpush1.msra.mxu0 0.0
    %138 = vmatprep.subr.mxu0 0.0
    %139 = vmatpush1.msra.mxu0 0.0
    %140 = vmatprep.subr.mxu0 0.0
    %141 = vmatpush1.msra.mxu0 0.0
    %142 = vmatprep.subr.mxu0 0.0
    %143 = vmatpush1.msra.mxu0 0.0
    %144 = vmatprep.subr.mxu0 0.0
    %145 = vmatpush1.msra.mxu0 0.0
    %146 = vmatprep.subr.mxu0 0.0
    %147 = vmatpush1.msra.mxu0 0.0
    %148 = vmatprep.subr.mxu0 0.0
    %149 = vmatpush1.msra.mxu0 0.0
    %150 = vmatprep.subr.mxu0 0.0
    %151 = vmatpush1.msra.mxu0 0.0
    %152 = vmatprep.subr.mxu0 0.0
    %153 = vmatpush1.msra.mxu0 0.0
    %154 = vmatprep.subr.mxu0 0.0
    %155 = vmatpush1.msra.mxu0 0.0
    %156 = vmatprep.subr.mxu0 0.0
    %157 = vmatpush1.msra.mxu0 0.0
    %158 = vmatprep.subr.mxu0 0.0
    %159 = vmatpush1.msra.mxu0 0.0
    %160 = vmatprep.subr.mxu0 0.0
    %161 = vmatpush1.msra.mxu0 0.0
    %162 = vmatprep.subr.mxu0 0.0
    %163 = vmatpush1.msra.mxu0 0.0
    %164 = vmatprep.subr.mxu0 0.0
    %165 = vmatpush1.msra.mxu0 0.0
    %166 = vmatprep.subr.mxu0 0.0
    %167 = vmatpush1.msra.mxu0 0.0
    %168 = vmatprep.mubr.f32.mxu0 0.0
    %169 = vmatmul.mubr.f32.gmra.mrb[0].mxu0 %v80
    %v170 = vpop.f32.mrb[0].mxu0
    %v171 = vadd.f32 %v102, %v170
    %v172 = vpop.f32.mrb[0].mxu0
    %173 = vdwg.mxu0
    %v174 = vld [vmem:[#allocation7] sm:$0xff]
    %v175 = vld [vmem:[#allocation7 + $0x8] sm:$0xff]
    %v176 = vld [vmem:[#allocation7 + $0x10] sm:$0xff]
    %v177 = vld [vmem:[#allocation7 + $0x18] sm:$0xff]
    %v178 = vld [vmem:[#allocation7 + $0x20] sm:$0xff]
    %v179 = vld [vmem:[#allocation7 + $0x28] sm:$0xff]
    %v180 = vld [vmem:[#allocation7 + $0x30] sm:$0xff]
    %v181 = vld [vmem:[#allocation7 + $0x38] sm:$0xff]
    %v182 = vld [vmem:[#allocation7 + $0x40] sm:$0xff]
    %v183 = vld [vmem:[#allocation7 + $0x48] sm:$0xff]
    %v184 = vld [vmem:[#allocation7 + $0x50] sm:$0xff]
    %v185 = vld [vmem:[#allocation7 + $0x58] sm:$0xff]
    %v186 = vld [vmem:[#allocation7 + $0x60] sm:$0xff]
    %v187 = vld [vmem:[#allocation7 + $0x68] sm:$0xff]
    %v188 = vld [vmem:[#allocation7 + $0x70] sm:$0xff]
    %v189 = vld [vmem:[#allocation7 + $0x78] sm:$0xff]
    %v190 = vld [vmem:[%s4] sm:$0x1]
    %v192 = vlaneseq
    %v193 = vshrl.u32 %v192, 7
    %v194 = vsub.s32 0, %v193
    %v195 = vrot.slane %v190, %v194
    %197 = vmatprep.subr.mxu0 0.0
    %198 = vmatpush1.msra.mxu0 %v174
    %199 = vmatprep.subr.mxu0 0.0
    %200 = vmatpush1.msra.mxu0 %v175
    %201 = vmatprep.subr.mxu0 0.0
    %202 = vmatpush1.msra.mxu0 %v176
    %203 = vmatprep.subr.mxu0 0.0
    %204 = vmatpush1.msra.mxu0 %v177
    %205 = vmatprep.subr.mxu0 0.0
    %206 = vmatpush1.msra.mxu0 %v178
    %207 = vmatprep.subr.mxu0 0.0
    %208 = vmatpush1.msra.mxu0 %v179
    %209 = vmatprep.subr.mxu0 0.0
    %210 = vmatpush1.msra.mxu0 %v180
    %211 = vmatprep.subr.mxu0 0.0
    %212 = vmatpush1.msra.mxu0 %v181
    %213 = vmatprep.subr.mxu0 0.0
    %214 = vmatpush1.msra.mxu0 %v182
    %215 = vmatprep.subr.mxu0 0.0
    %216 = vmatpush1.msra.mxu0 %v183
    %217 = vmatprep.subr.mxu0 0.0
    %218 = vmatpush1.msra.mxu0 %v184
    %219 = vmatprep.subr.mxu0 0.0
    %220 = vmatpush1.msra.mxu0 %v185
    %221 = vmatprep.subr.mxu0 0.0
    %222 = vmatpush1.msra.mxu0 %v186
    %223 = vmatprep.subr.mxu0 0.0
    %224 = vmatpush1.msra.mxu0 %v187
    %225 = vmatprep.subr.mxu0 0.0
    %226 = vmatpush1.msra.mxu0 %v188
    %227 = vmatprep.subr.mxu0 0.0
    %228 = vmatpush1.msra.mxu0 %v189
    %229 = vmatprep.subr.mxu0 0.0
    %230 = vmatpush1.msra.mxu0 0.0
    %231 = vmatprep.subr.mxu0 0.0
    %232 = vmatpush1.msra.mxu0 0.0
    %233 = vmatprep.subr.mxu0 0.0
    %234 = vmatpush1.msra.mxu0 0.0
    %235 = vmatprep.subr.mxu0 0.0
    %236 = vmatpush1.msra.mxu0 0.0
    %237 = vmatprep.subr.mxu0 0.0
    %238 = vmatpush1.msra.mxu0 0.0
    %239 = vmatprep.subr.mxu0 0.0
    %240 = vmatpush1.msra.mxu0 0.0
    %241 = vmatprep.subr.mxu0 0.0
    %242 = vmatpush1.msra.mxu0 0.0
    %243 = vmatprep.subr.mxu0 0.0
    %244 = vmatpush1.msra.mxu0 0.0
    %245 = vmatprep.subr.mxu0 0.0
    %246 = vmatpush1.msra.mxu0 0.0
    %247 = vmatprep.subr.mxu0 0.0
    %248 = vmatpush1.msra.mxu0 0.0
    %249 = vmatprep.subr.mxu0 0.0
    %250 = vmatpush1.msra.mxu0 0.0
    %251 = vmatprep.subr.mxu0 0.0
    %252 = vmatpush1.msra.mxu0 0.0
    %253 = vmatprep.subr.mxu0 0.0
    %254 = vmatpush1.msra.mxu0 0.0
    %255 = vmatprep.subr.mxu0 0.0
    %256 = vmatpush1.msra.mxu0 0.0
    %257 = vmatprep.subr.mxu0 0.0
    %258 = vmatpush1.msra.mxu0 0.0
    %259 = vmatprep.subr.mxu0 0.0
    %260 = vmatpush1.msra.mxu0 0.0
    %261 = vmatprep.mubr.f32.mxu0 0.0
    %262 = vmatmul.mubr.f32.gmra.mrb[0].mxu0 %v171
    %v263 = vpop.f32.mrb[0].mxu0
    %v264 = vadd.f32 %v195, %v263
    %v265 = vpop.f32.mrb[0].mxu0
    %266 = vdwg.mxu0
    %v267 = vmax.f32 %v264, 0.0
    %v268 = vld [vmem:[#allocation8] sm:$0xff]
    %v269 = vld [vmem:[#allocation8 + $0x8] sm:$0xff]
    %v270 = vld [vmem:[#allocation8 + $0x10] sm:$0xff]
    %v271 = vld [vmem:[#allocation8 + $0x18] sm:$0xff]
    %v272 = vld [vmem:[#allocation8 + $0x20] sm:$0xff]
    %v273 = vld [vmem:[#allocation8 + $0x28] sm:$0xff]
    %v274 = vld [vmem:[#allocation8 + $0x30] sm:$0xff]
    %v275 = vld [vmem:[#allocation8 + $0x38] sm:$0xff]
    %v276 = vld [vmem:[#allocation8 + $0x40] sm:$0xff]
    %v277 = vld [vmem:[#allocation8 + $0x48] sm:$0xff]
    %v278 = vld [vmem:[#allocation8 + $0x50] sm:$0xff]
    %v279 = vld [vmem:[#allocation8 + $0x58] sm:$0xff]
    %v280 = vld [vmem:[#allocation8 + $0x60] sm:$0xff]
    %v281 = vld [vmem:[#allocation8 + $0x68] sm:$0xff]
    %v282 = vld [vmem:[#allocation8 + $0x70] sm:$0xff]
    %v283 = vld [vmem:[#allocation8 + $0x78] sm:$0xff]
    %v284 = vld [vmem:[%s6] sm:$0x1]
    %v286 = vlaneseq
    %v287 = vshrl.u32 %v286, 7
    %v288 = vsub.s32 0, %v287
    %v289 = vrot.slane %v284, %v288
    %291 = vmatprep.subr.mxu0 0.0
    %292 = vmatpush1.msra.mxu0 %v268
    %293 = vmatprep.subr.mxu0 0.0
    %294 = vmatpush1.msra.mxu0 %v269
    %295 = vmatprep.subr.mxu0 0.0
    %296 = vmatpush1.msra.mxu0 %v270
    %297 = vmatprep.subr.mxu0 0.0
    %298 = vmatpush1.msra.mxu0 %v271
    %299 = vmatprep.subr.mxu0 0.0
    %300 = vmatpush1.msra.mxu0 %v272
    %301 = vmatprep.subr.mxu0 0.0
    %302 = vmatpush1.msra.mxu0 %v273
    %303 = vmatprep.subr.mxu0 0.0
    %304 = vmatpush1.msra.mxu0 %v274
    %305 = vmatprep.subr.mxu0 0.0
    %306 = vmatpush1.msra.mxu0 %v275
    %307 = vmatprep.subr.mxu0 0.0
    %308 = vmatpush1.msra.mxu0 %v276
    %309 = vmatprep.subr.mxu0 0.0
    %310 = vmatpush1.msra.mxu0 %v277
    %311 = vmatprep.subr.mxu0 0.0
    %312 = vmatpush1.msra.mxu0 %v278
    %313 = vmatprep.subr.mxu0 0.0
    %314 = vmatpush1.msra.mxu0 %v279
    %315 = vmatprep.subr.mxu0 0.0
    %316 = vmatpush1.msra.mxu0 %v280
    %317 = vmatprep.subr.mxu0 0.0
    %318 = vmatpush1.msra.mxu0 %v281
    %319 = vmatprep.subr.mxu0 0.0
    %320 = vmatpush1.msra.mxu0 %v282
    %321 = vmatprep.subr.mxu0 0.0
    %322 = vmatpush1.msra.mxu0 %v283
    %323 = vmatprep.subr.mxu0 0.0
    %324 = vmatpush1.msra.mxu0 0.0
    %325 = vmatprep.subr.mxu0 0.0
    %326 = vmatpush1.msra.mxu0 0.0
    %327 = vmatprep.subr.mxu0 0.0
    %328 = vmatpush1.msra.mxu0 0.0
    %329 = vmatprep.subr.mxu0 0.0
    %330 = vmatpush1.msra.mxu0 0.0
    %331 = vmatprep.subr.mxu0 0.0
    %332 = vmatpush1.msra.mxu0 0.0
    %333 = vmatprep.subr.mxu0 0.0
    %334 = vmatpush1.msra.mxu0 0.0
    %335 = vmatprep.subr.mxu0 0.0
    %336 = vmatpush1.msra.mxu0 0.0
    %337 = vmatprep.subr.mxu0 0.0
    %338 = vmatpush1.msra.mxu0 0.0
    %339 = vmatprep.subr.mxu0 0.0
    %340 = vmatpush1.msra.mxu0 0.0
    %341 = vmatprep.subr.mxu0 0.0
    %342 = vmatpush1.msra.mxu0 0.0
    %343 = vmatprep.subr.mxu0 0.0
    %344 = vmatpush1.msra.mxu0 0.0
    %345 = vmatprep.subr.mxu0 0.0
    %346 = vmatpush1.msra.mxu0 0.0
    %347 = vmatprep.subr.mxu0 0.0
    %348 = vmatpush1.msra.mxu0 0.0
    %349 = vmatprep.subr.mxu0 0.0
    %350 = vmatpush1.msra.mxu0 0.0
    %351 = vmatprep.subr.mxu0 0.0
    %352 = vmatpush1.msra.mxu0 0.0
    %353 = vmatprep.subr.mxu0 0.0
    %354 = vmatpush1.msra.mxu0 0.0
    %355 = vmatprep.mubr.f32.mxu0 0.0
    %356 = vmatmul.mubr.f32.gmra.mrb[0].mxu0 %v267
    %v357 = vpop.f32.mrb[0].mxu0
    %v358 = vadd.f32 %v289, %v357
    %v359 = vpop.f32.mrb[0].mxu0
    %360 = vdwg.mxu0
    %v361 = vlaneseq
    %v362 = vand.u32 %v361, 127
    %vm363 = vcmp.lt.s32.totalorder %v362, 16
    %v364 = vsel %vm363, %v358, -inf
    %365 = vmax.xlane.f32.xlu0 %v364
    %v366 = vpop.xlane.xlu0 %365
    %v367 = vsub.f32 %v364, %v366
    %v368 = vmul.f32 %v367, 1.442695
    %v369 = vpow.pop %v368
    %370 = vadd.xlane.f32.xlu0 %v369
    %v371 = vpop.xlane.xlu0 %370
    %v372 = vrcp.pop %v371
    %v373 = vmul.f32 %v369, %v372
    %374 = vst [vmem:[#allocation10] sm:$0xff] %v373
    // Predicated region
    $region46: #{tpu_custom_call.1} parent=1 // pred_check
      _
    $region47: #{tpu_custom_call.1} parent=1 // pred_check_branch
      %376 = sbr.rel (0) target = $region49
    $region48: #{tpu_custom_call.1} parent=1 // pred_region
      %s378 = ssub.s32 128, 128
      %379 = vsyncadd [#allocation4], %s378
      %s381 = sshll.u32 [#allocation10], 4
      %s382 = int_to_ptr.vmem [resolvable:$true] %s381
      %384 = dma.vmem_to_hbm [thread:$0]  %s382, 128, %s7, [#allocation4]
    $region49: #{tpu_custom_call.1} parent=1 // pred_fallthru
      _
    // Predicated region
    $region50: #{tpu_custom_call.1} parent=1 // pred_check
      _
    $region51: #{tpu_custom_call.1} parent=1 // pred_check_branch
      %386 = sbr.rel (0) target = $region53
    $region52: #{tpu_custom_call.1} parent=1 // pred_region
      %387 = dma.done [#allocation4], 128
    $region53: #{tpu_custom_call.1} parent=1 // pred_fallthru
      _
    %388 = vsyncpa [#allocation3], 1
    %389 = vsyncpa [#allocation6], 1
    %390 = vsyncpa [#allocation9], 1
    %391 = vsyncpa [#allocation4], 1

</llo_original>
